<compile_context>
chip_gen: v7x
topology: tpu7x:2x2x1
jax: 0.10.0
libtpu: 0.0.40
codegen_flags: <defaults>
</compile_context>

<pallas_src>
import functools

import jax
import jax.numpy as jnp
from jax.experimental import pallas as pl
from jax.experimental.pallas import tpu as pltpu


def _round_up(n, m):
    return ((n + m - 1) // m) * m


def _mlp_kernel(x_ref, w1_ref, b1_ref, w3t_ref, b3_ref, o_ref, *, matmul_dtype):
    # fc1 on the MXU: bf16 (or f32) operands, f32 accumulation.
    h = jnp.dot(x_ref[...].astype(matmul_dtype),
                w1_ref[...].astype(matmul_dtype),
                preferred_element_type=jnp.float32)
    # bias + ReLU in f32 on the VPU.
    h = jnp.maximum(h + b1_ref[...], 0.0)

    if o_ref.shape[-1] == 1:
        # N=1 second layer: VPU multiply + XLU lane reduce; skip the MXU and its
        # result-FIFO drain entirely.  h and w3 stay f32 here (full precision).
        z = jnp.sum(h * w3t_ref[...], axis=-1, keepdims=True) + b3_ref[...]
    else:
        # General path (output_size > 1): MXU matmul; explicit (documented)
        # downcast of the f32 activations to the matmul dtype.
        z = jax.lax.dot_general(
            h.astype(matmul_dtype), w3t_ref[...].astype(matmul_dtype),
            (((1,), (1,)), ((), ())),
            preferred_element_type=jnp.float32) + b3_ref[...]

    # EUP-routed logistic; elementwise stays f32.
    o_ref[...] = jax.nn.sigmoid(z).astype(o_ref.dtype)


@functools.partial(jax.jit, static_argnames=("block_batch", "matmul_dtype"))
def three_layer_classifier(x, w1, b1, w3, b3, *, block_batch=512,
                           matmul_dtype=jnp.bfloat16):
    """x: (B, in).  w1: (hidden, in), b1: (hidden,), w3: (out, hidden), b3: (out,)
    — PyTorch nn.Linear layouts.  Returns (B, out) float32 sigmoid scores."""
    B, K = x.shape
    H = w1.shape[0]
    O = w3.shape[0]

    # ---- layout prep (once per call, negligible): lane/sublane alignment ----
    K_pad = _round_up(K, 128)                 # lane-dense contraction dim
    H_pad = _round_up(H, 128)                 # lane-dense hidden dim
    TB = min(block_batch, _round_up(B, 16))   # sublane-aligned batch tile (bf16-safe)
    B_pad = _round_up(B, TB)

    x_p = jnp.zeros((B_pad, K_pad), matmul_dtype).at[:B, :K].set(
        x.astype(matmul_dtype))
    w1_p = jnp.zeros((K_pad, H_pad), matmul_dtype).at[:K, :H].set(
        w1.T.astype(matmul_dtype))                       # pre-transposed (in, hidden)
    b1_p = jnp.zeros((1, H_pad), jnp.float32).at[0, :H].set(b1.astype(jnp.float32))
    # Second-layer operands kept f32 (VPU path when O == 1); PyTorch (out, hidden)
    # layout is exactly what the lane-broadcast multiply wants.
    w3_p = jnp.zeros((O, H_pad), jnp.float32).at[:, :H].set(w3.astype(jnp.float32))
    b3_p = b3.astype(jnp.float32).reshape(1, O)

    grid = (B_pad // TB,)
    kernel = functools.partial(_mlp_kernel, matmul_dtype=matmul_dtype)

    out = pl.pallas_call(
        kernel,
        out_shape=jax.ShapeDtypeStruct((B_pad, O), jnp.float32),
        grid_spec=pltpu.PrefetchScalarGridSpec(
            num_scalar_prefetch=0,
            grid=grid,
            in_specs=[
                pl.BlockSpec((TB, K_pad), lambda i: (i, 0)),      # x: tiled over batch
                pl.BlockSpec((K_pad, H_pad), lambda i: (0, 0)),   # weights stay VMEM-
                pl.BlockSpec((1, H_pad), lambda i: (0, 0)),       # resident across the
                pl.BlockSpec((O, H_pad), lambda i: (0, 0)),       # whole grid (no
                pl.BlockSpec((1, O), lambda i: (0, 0)),           # re-DMA per step)
            ],
            # TODO(synk): output last dim is 1 (lane-sparse masked store) — fine for a
            # final per-row score; keep lane-dense if this ever feeds further TPU work.
            out_specs=pl.BlockSpec((TB, O), lambda i: (i, 0)),
        ),
        compiler_params=pltpu.CompilerParams(
            dimension_semantics=("parallel",),          # shard batch tiles over TCs (v7x)
            vmem_limit_bytes=32 * 1024 * 1024,          # ample for these tiles, v7x-safe
        ),
    )(x_p, w1_p, b1_p, w3_p, b3_p)

    return out[:B]


def init_params(key, input_size, hidden_size1, output_size, dtype=jnp.float32):
    """PyTorch nn.Linear default init, PyTorch layouts: w (out, in), b (out,)."""
    k1, k2, k3, k4 = jax.random.split(key, 4)
    bound1 = 1.0 / (input_size ** 0.5)
    bound3 = 1.0 / (hidden_size1 ** 0.5)
    w1 = jax.random.uniform(k1, (hidden_size1, input_size), dtype, -bound1, bound1)
    b1 = jax.random.uniform(k2, (hidden_size1,), dtype, -bound1, bound1)
    w3 = jax.random.uniform(k3, (output_size, hidden_size1), dtype, -bound3, bound3)
    b3 = jax.random.uniform(k4, (output_size,), dtype, -bound3, bound3)
    return w1, b1, w3, b3


def reference(x, w1, b1, w3, b3, matmul_dtype=jnp.float32):
    """Pure-JAX reference.  matmul_dtype controls fc1 operand precision so a
    bf16-consistent reference can be compared tightly against the kernel."""
    h = jnp.dot(x.astype(matmul_dtype), w1.T.astype(matmul_dtype),
                preferred_element_type=jnp.float32,
                precision=jax.lax.Precision.HIGHEST) + b1
    h = jnp.maximum(h, 0.0)
    z = jnp.einsum("bh,oh->bo", h, w3,
                   preferred_element_type=jnp.float32,
                   precision=jax.lax.Precision.HIGHEST) + b3
    return jax.nn.sigmoid(z)


if __name__ == "__main__":
    key = jax.random.PRNGKey(0)
    kx, kp, kx2 = jax.random.split(key, 3)

    batch = 8
    input_size = 34      # keypoint feature vector size
    hidden_size1 = 32
    output_size = 1      # binary fight / no-fight score

    x = jax.random.normal(kx, (batch, input_size), jnp.float32)
    params = init_params(kp, input_size, hidden_size1, output_size)

    out = three_layer_classifier(x, *params)
    out = jax.block_until_ready(out)
    assert out.shape == (batch, output_size)

    # Tight check vs a reference using the same bf16 fc1 operand precision.
    ref_bf16 = reference(x, *params, matmul_dtype=jnp.bfloat16)
    assert jnp.allclose(out, ref_bf16, atol=5e-5, rtol=1e-4), "mismatch vs bf16 reference"
    # Loose check vs the full-f32 reference (bf16 rounding only).
    ref_f32 = reference(x, *params, matmul_dtype=jnp.float32)
    assert jnp.allclose(out, ref_f32, atol=1e-2), "mismatch vs f32 reference"

    # Exercise the multi-tile (grid > 1) path with a larger batch.
    big_batch = 1024
    xb = jax.random.normal(kx2, (big_batch, input_size), jnp.float32)
    out_b = jax.block_until_ready(three_layer_classifier(xb, *params))
    assert out_b.shape == (big_batch, output_size)
    assert jnp.allclose(out_b, reference(xb, *params, matmul_dtype=jnp.bfloat16),
                        atol=5e-5, rtol=1e-4), "mismatch vs bf16 reference (big batch)"

    print("KERNEL_OK")
</pallas_src>

<mosaic_0001>
module attributes {stable_mosaic.version = 11 : i64} {
  func.func @_mlp_kernel(%arg0: i32, %arg1: memref<16x128xbf16, #tpu.memory_space<vmem>>, %arg2: memref<128x128xbf16, #tpu.memory_space<vmem>>, %arg3: memref<1x128xf32, #tpu.memory_space<vmem>>, %arg4: memref<1x128xf32, #tpu.memory_space<vmem>>, %arg5: memref<1x1xf32, #tpu.memory_space<vmem>>, %arg6: memref<16x1xf32, #tpu.memory_space<vmem>>) attributes {dimension_semantics = [#tpu.dimension_semantics<parallel>], iteration_bounds = array<i64: 1>, scalar_prefetch = 0 : i64, scratch_operands = 0 : i64, tpu.core_type = #tpu.core_type<tc>, window_params = [{transform_indices = @transform_0, window_bounds = array<i64: 16, 128>}, {pipeline_mode = #tpu.pipeline_mode<synchronous>, transform_indices = @transform_1, window_bounds = array<i64: 128, 128>}, {pipeline_mode = #tpu.pipeline_mode<synchronous>, transform_indices = @transform_2, window_bounds = array<i64: 1, 128>}, {pipeline_mode = #tpu.pipeline_mode<synchronous>, transform_indices = @transform_3, window_bounds = array<i64: 1, 128>}, {pipeline_mode = #tpu.pipeline_mode<synchronous>, transform_indices = @transform_4, window_bounds = array<i64: 1, 1>}, {transform_indices = @transform_5, window_bounds = array<i64: 16, 1>}]} {
    %c0 = arith.constant 0 : index
    %c0_0 = arith.constant 0 : index
    %0 = vector.load %arg1[%c0, %c0_0] : memref<16x128xbf16, #tpu.memory_space<vmem>>, vector<16x128xbf16>
    %c0_1 = arith.constant 0 : index
    %c0_2 = arith.constant 0 : index
    %1 = vector.load %arg2[%c0_1, %c0_2] : memref<128x128xbf16, #tpu.memory_space<vmem>>, vector<128x128xbf16>
    %cst = arith.constant dense<0.000000e+00> : vector<16x128xf32>
    %2 = tpu.matmul %0, %1, %cst {dimension_numbers = #tpu.dot_dimension_numbers<[1], [0], [0], [1], [0, 0, 1, 1], [], []>} : vector<16x128xbf16>, vector<128x128xbf16>, vector<16x128xf32> -> vector<16x128xf32>
    %c0_3 = arith.constant 0 : index
    %c0_4 = arith.constant 0 : index
    %3 = vector.load %arg3[%c0_3, %c0_4] : memref<1x128xf32, #tpu.memory_space<vmem>>, vector<1x128xf32>
    %4 = vector.broadcast %3 : vector<1x128xf32> to vector<16x128xf32>
    %5 = arith.addf %2, %4 : vector<16x128xf32>
    %cst_5 = arith.constant 0.000000e+00 : f32
    %6 = vector.broadcast %cst_5 : f32 to vector<16x128xf32>
    %7 = arith.maximumf %5, %6 : vector<16x128xf32>
    %c0_6 = arith.constant 0 : index
    %c0_7 = arith.constant 0 : index
    %8 = vector.load %arg4[%c0_6, %c0_7] : memref<1x128xf32, #tpu.memory_space<vmem>>, vector<1x128xf32>
    %9 = vector.broadcast %8 : vector<1x128xf32> to vector<16x128xf32>
    %10 = arith.mulf %7, %9 : vector<16x128xf32>
    %cst_8 = arith.constant dense<0.000000e+00> : vector<16xf32>
    %11 = vector.multi_reduction <add>, %10, %cst_8 [1] : vector<16x128xf32> to vector<16xf32>
    %12 = vector.shape_cast %11 : vector<16xf32> to vector<16x1xf32>
    %c0_9 = arith.constant 0 : index
    %c0_10 = arith.constant 0 : index
    %13 = vector.load %arg5[%c0_9, %c0_10] : memref<1x1xf32, #tpu.memory_space<vmem>>, vector<1x1xf32>
    %14 = vector.broadcast %13 : vector<1x1xf32> to vector<16x1xf32>
    %15 = arith.addf %12, %14 : vector<16x1xf32>
    %16 = arith.negf %15 : vector<16x1xf32>
    %17 = math.exp %16 : vector<16x1xf32>
    %cst_11 = arith.constant 1.000000e+00 : f32
    %18 = vector.broadcast %cst_11 : f32 to vector<16x1xf32>
    %19 = arith.addf %18, %17 : vector<16x1xf32>
    %20 = arith.divf %18, %19 : vector<16x1xf32>
    %c0_12 = arith.constant 0 : index
    %c0_13 = arith.constant 0 : index
    %21 = vector.load %arg6[%c0_12, %c0_13] : memref<16x1xf32, #tpu.memory_space<vmem>>, vector<16x1xf32>
    tpu.vector_store %arg6[%c0_12, %c0_13], %20 {strides = array<i32>} : memref<16x1xf32, #tpu.memory_space<vmem>>, vector<16x1xf32>,
    return
  }
  func.func @transform_0(%arg0: i32) -> (i32, i32) {
    %c0_i32 = arith.constant 0 : i32
    %c0_i32_0 = arith.constant 0 : i32
    return %arg0, %c0_i32 : i32, i32
  }
  func.func @transform_1(%arg0: i32) -> (i32, i32) {
    %c0_i32 = arith.constant 0 : i32
    %c0_i32_0 = arith.constant 0 : i32
    %c0_i32_1 = arith.constant 0 : i32
    return %c0_i32, %c0_i32_0 : i32, i32
  }
  func.func @transform_2(%arg0: i32) -> (i32, i32) {
    %c0_i32 = arith.constant 0 : i32
    %c0_i32_0 = arith.constant 0 : i32
    %c0_i32_1 = arith.constant 0 : i32
    return %c0_i32, %c0_i32_0 : i32, i32
  }
  func.func @transform_3(%arg0: i32) -> (i32, i32) {
    %c0_i32 = arith.constant 0 : i32
    %c0_i32_0 = arith.constant 0 : i32
    %c0_i32_1 = arith.constant 0 : i32
    return %c0_i32, %c0_i32_0 : i32, i32
  }
  func.func @transform_4(%arg0: i32) -> (i32, i32) {
    %c0_i32 = arith.constant 0 : i32
    %c0_i32_0 = arith.constant 0 : i32
    %c0_i32_1 = arith.constant 0 : i32
    return %c0_i32, %c0_i32_0 : i32, i32
  }
  func.func @transform_5(%arg0: i32) -> (i32, i32) {
    %c0_i32 = arith.constant 0 : i32
    %c0_i32_0 = arith.constant 0 : i32
    return %arg0, %c0_i32 : i32, i32
  }
}

</mosaic_0001>

<llo_original>
// kernel: three_layer_classifier.1
$region0: #{three_layer_classifier.1}
  #allocation0 [shape = 'u32[]', space=smem, size = 0x4, offset = 0x4, fixed_abs, tag = 'smem constant byte address 0x4 - core index']
  #allocation1 [shape = 'u32[144,128]{1,0:T(1,128)}', space=vmem, size = 0x12000, scoped, tag = 'internal scratch']
  #allocation2 [shape = 'f32[1,1]{1,0:T(1,128)S(1)}', space=vmem, size = 0x200, scoped, tag = 'scoped memory for three_layer_classifier.1']
  %s0 = inlined_call_operand.vmem [shape: bf16[16,128], index: 0, kind: input, shape index: {}]
  %s1 = inlined_call_operand.vmem [shape: bf16[128,128], index: 1, kind: input, shape index: {}]
  %s2 = inlined_call_operand.vmem [shape: f32[1,128], index: 2, kind: input, shape index: {}]
  %s3 = inlined_call_operand.vmem [shape: f32[1,128], index: 3, kind: input, shape index: {}]
  %s4 = inlined_call_operand.<no memory space> [shape: f32[1,1], index: 4, kind: input, shape index: {}]
  %s5 = inlined_call_operand.vmem [shape: f32[16,1], index: 5, kind: output, shape index: {}]
  %s6 = sld [smem:[#allocation0]]
  $region30: #{three_layer_classifier.1} parent=0
    _
  %s8 = ssub.s32 1, %s6
  %s9 = scalar_select 0, %s8, %s6
  %v10 = vstv %s4
  %11 = vst [vmem:[#allocation2] sm:$0x1] %v10
  // Predicated region
  $region2: #{three_layer_classifier.1} parent=0 // pred_check
    _
  $region3: #{three_layer_classifier.1} parent=0 // pred_check_branch
    %13 = sbr.rel (0) target = $region5
  $region4: #{three_layer_classifier.1} parent=0 // pred_region
    _
  $region5: #{three_layer_classifier.1} parent=0 // pred_fallthru
    _
  // Predicated region
  $region6: #{three_layer_classifier.1} parent=0 // pred_check
    _
  $region7: #{three_layer_classifier.1} parent=0 // pred_check_branch
    %15 = sbr.rel (0) target = $region9
  $region8: #{three_layer_classifier.1} parent=0 // pred_region
    _
  $region9: #{three_layer_classifier.1} parent=0 // pred_fallthru
    _
  // Predicated region
  $region10: #{three_layer_classifier.1} parent=0 // pred_check
    _
  $region11: #{three_layer_classifier.1} parent=0 // pred_check_branch
    %17 = sbr.rel (0) target = $region13
  $region12: #{three_layer_classifier.1} parent=0 // pred_region
    _
  $region13: #{three_layer_classifier.1} parent=0 // pred_fallthru
    _
  // Predicated region
  $region14: #{three_layer_classifier.1} parent=0 // pred_check
    _
  $region15: #{three_layer_classifier.1} parent=0 // pred_check_branch
    %19 = sbr.rel (0) target = $region17
  $region16: #{three_layer_classifier.1} parent=0 // pred_region
    _
  $region17: #{three_layer_classifier.1} parent=0 // pred_fallthru
    _
  // Predicated region
  $region18: #{three_layer_classifier.1} parent=0 // pred_check
    _
  $region19: #{three_layer_classifier.1} parent=0 // pred_check_branch
    %21 = sbr.rel (0) target = $region21
  $region20: #{three_layer_classifier.1} parent=0 // pred_region
    _
  $region21: #{three_layer_classifier.1} parent=0 // pred_fallthru
    _
  %v23 = vld [vmem:[%s0] sm:$0xf]
  %v24 = vld [vmem:[%s0 + $0x4] sm:$0xf]
  %v25 = vld [vmem:[%s1] sm:$0xf]
  %v26 = vld [vmem:[%s1 + $0x4] sm:$0xf]
  %v27 = vld [vmem:[%s1 + $0x8] sm:$0xf]
  %v28 = vld [vmem:[%s1 + $0xc] sm:$0xf]
  %v29 = vld [vmem:[%s1 + $0x10] sm:$0xf]
  %v30 = vld [vmem:[%s1 + $0x14] sm:$0xf]
  %v31 = vld [vmem:[%s1 + $0x18] sm:$0xf]
  %v32 = vld [vmem:[%s1 + $0x1c] sm:$0xf]
  %v33 = vld [vmem:[%s1 + $0x20] sm:$0xf]
  %v34 = vld [vmem:[%s1 + $0x24] sm:$0xf]
  %v35 = vld [vmem:[%s1 + $0x28] sm:$0xf]
  %v36 = vld [vmem:[%s1 + $0x2c] sm:$0xf]
  %v37 = vld [vmem:[%s1 + $0x30] sm:$0xf]
  %v38 = vld [vmem:[%s1 + $0x34] sm:$0xf]
  %v39 = vld [vmem:[%s1 + $0x38] sm:$0xf]
  %v40 = vld [vmem:[%s1 + $0x3c] sm:$0xf]
  %v41 = vld [vmem:[%s2] sm:$0x1]
  %v43 = vlaneseq
  %v44 = vshrl.u32 %v43, 7
  %v45 = vsub.s32 0, %v44
  %v46 = vrot.slane %v41, %v45
  %v50 = vunpack.c.l.b16 %v23
  %v51 = vunpack.c.l.b16 %v24
  %v52 = vpack.c.b16 %v51, %v50
  %v70 = vunpack.c.l.b16 %v25
  %v71 = vunpack.c.l.b16 %v26
  %v72 = vunpack.c.l.b16 %v27
  %v73 = vunpack.c.l.b16 %v28
  %v74 = vunpack.c.l.b16 %v29
  %v75 = vunpack.c.l.b16 %v30
  %v76 = vunpack.c.l.b16 %v31
  %v77 = vunpack.c.l.b16 %v32
  %v78 = vunpack.c.l.b16 %v33
  %v79 = vunpack.c.l.b16 %v34
  %v80 = vunpack.c.l.b16 %v35
  %v81 = vunpack.c.l.b16 %v36
  %v82 = vunpack.c.l.b16 %v37
  %v83 = vunpack.c.l.b16 %v38
  %v84 = vunpack.c.l.b16 %v39
  %v85 = vunpack.c.l.b16 %v40
  %v86 = vpack.c.b16 %v71, %v70
  %v87 = vpack.c.b16 %v73, %v72
  %v88 = vpack.c.b16 %v75, %v74
  %v89 = vpack.c.b16 %v77, %v76
  %v90 = vpack.c.b16 %v79, %v78
  %v91 = vpack.c.b16 %v81, %v80
  %v92 = vpack.c.b16 %v83, %v82
  %v93 = vpack.c.b16 %v85, %v84
  %102 = vmatprep.subr.bf16.mxu0 0
  %103 = vmatpush1.bf16.msra.mxu0 %v86
  %104 = vmatprep.subr.bf16.mxu0 0
  %105 = vmatpush1.bf16.msra.mxu0 %v87
  %106 = vmatprep.subr.bf16.mxu0 0
  %107 = vmatpush1.bf16.msra.mxu0 %v88
  %108 = vmatprep.subr.bf16.mxu0 0
  %109 = vmatpush1.bf16.msra.mxu0 %v89
  %110 = vmatprep.subr.bf16.mxu0 0
  %111 = vmatpush1.bf16.msra.mxu0 %v90
  %112 = vmatprep.subr.bf16.mxu0 0
  %113 = vmatpush1.bf16.msra.mxu0 %v91
  %114 = vmatprep.subr.bf16.mxu0 0
  %115 = vmatpush1.bf16.msra.mxu0 %v92
  %116 = vmatprep.subr.bf16.mxu0 0
  %117 = vmatpush1.bf16.msra.mxu0 %v93
  %118 = vmatprep.subr.bf16.mxu0 0
  %119 = vmatpush1.bf16.msra.mxu0 0
  %120 = vmatprep.subr.bf16.mxu0 0
  %121 = vmatpush1.bf16.msra.mxu0 0
  %122 = vmatprep.subr.bf16.mxu0 0
  %123 = vmatpush1.bf16.msra.mxu0 0
  %124 = vmatprep.subr.bf16.mxu0 0
  %125 = vmatpush1.bf16.msra.mxu0 0
  %126 = vmatprep.subr.bf16.mxu0 0
  %127 = vmatpush1.bf16.msra.mxu0 0
  %128 = vmatprep.subr.bf16.mxu0 0
  %129 = vmatpush1.bf16.msra.mxu0 0
  %130 = vmatprep.subr.bf16.mxu0 0
  %131 = vmatpush1.bf16.msra.mxu0 0
  %132 = vmatprep.subr.bf16.mxu0 0
  %133 = vmatpush1.bf16.msra.mxu0 0
  %134 = vmatprep.mubr.bf16.mxu0 0
  %135 = vmatmul.mubr.bf16.gmra.mrb[0].mxu0 %v52
  %v136 = vpop.f32.mrb[0].mxu0
  %v137 = vadd.f32 %v46, %v136
  %v138 = vpop.f32.mrb[0].mxu0
  %v139 = vpop.f32.mrb[0].mxu0
  %v140 = vadd.f32 %v46, %v139
  %v141 = vpop.f32.mrb[0].mxu0
  %142 = vdwg.mxu0
  %v143 = vmax.f32 %v137, 0.0
  %v144 = vmax.f32 %v140, 0.0
  %v145 = vld [vmem:[%s3] sm:$0x1]
  %v147 = vlaneseq
  %v148 = vshrl.u32 %v147, 7
  %v149 = vsub.s32 0, %v148
  %v150 = vrot.slane %v145, %v149
  %v152 = vmul.f32 %v143, %v150
  %v153 = vmul.f32 %v144, %v150
  %154 = vadd.xlane.f32.xlu0 %v152
  %v155 = vpop.xlane.xlu0 %154
  %156 = vadd.xlane.f32.xlu0 %v153
  %v157 = vpop.xlane.xlu0 %156
  %v158 = vld [vmem:[#allocation2] sm:$0x1]
  %v160 = vlaneseq
  %v161 = vshrl.u32 %v160, 7
  %v162 = vsub.s32 0, %v161
  %v163 = vrot.slane %v158, %v162
  %v165 = vadd.f32 %v155, %v163
  %v166 = vadd.f32 %v157, %v163
  %v167 = vxor.u32 %v165, 2147483648
  %v168 = vxor.u32 %v166, 2147483648
  %v169 = vmul.f32 %v167, 1.442695
  %v170 = vpow.pop %v169
  %v171 = vmul.f32 %v168, 1.442695
  %v172 = vpow.pop %v171
  %v173 = vadd.f32 %v170, 1.0
  %v174 = vadd.f32 %v172, 1.0
  %v175 = vrcp.pop %v173
  %v176 = vmul.f32 1.0, %v175
  %v177 = vrcp.pop %v174
  %v178 = vmul.f32 1.0, %v177
  %vm179 = vcmask 7168
  %180 = vst.msk [vmem:[%s5] sm:$0xff] %vm179, %v176
  %181 = vst.msk [vmem:[%s5 + $0x8] sm:$0xff] %vm179, %v178
  // Predicated region
  $region22: #{three_layer_classifier.1} parent=0 // pred_check
    _
  $region23: #{three_layer_classifier.1} parent=0 // pred_check_branch
    %183 = sbr.rel (0) target = $region25
  $region24: #{three_layer_classifier.1} parent=0 // pred_region
    _
  $region25: #{three_layer_classifier.1} parent=0 // pred_fallthru
    _
  // Predicated region
  $region26: #{three_layer_classifier.1} parent=0 // pred_check
    _
  $region27: #{three_layer_classifier.1} parent=0 // pred_check_branch
    %185 = sbr.rel (0) target = $region29
  $region28: #{three_layer_classifier.1} parent=0 // pred_region
    _
  $region29: #{three_layer_classifier.1} parent=0 // pred_fallthru
    _

</llo_original>
